<compile_context>
chip_gen: v6e
topology: v6e:2x2x1
jax: 0.10.0
libtpu: 0.0.40
codegen_flags: <defaults>
</compile_context>

<pallas_src>
import jax
import jax.numpy as jnp
from jax.experimental import pallas as pl
from jax.experimental.pallas import tpu as pltpu

IN_FEATURES = 3
OUT_FEATURES = 8
_LANE_TILE = 512          # >=512-lane tiles reach ~85% of HBM roofline
_SMALL_B_GRIDLESS = 512   # below this, a single gridless body is cheaper


def linear_kernel(x_ref, w_ref, b_ref, o_ref):
    # x_ref: (3, TB)  batch on lanes
    # w_ref: (8, 3)   PyTorch (out, in) layout
    # b_ref: (8, 1)
    # o_ref: (8, TB)
    # Hoisted broadcasts -> stride-0 reads; inner combine is pure VALU.
    w = w_ref[...]
    w0 = w[:, 0:1]            # (8, 1) lane-broadcast
    w1 = w[:, 1:2]
    w2 = w[:, 2:3]
    x0 = x_ref[0:1, :]        # (1, TB) sublane-broadcast
    x1 = x_ref[1:2, :]
    x2 = x_ref[2:3, :]
    y = b_ref[...] + w0 * x0  # (8, TB), lane-dense
    y = y + w1 * x1
    y = y + w2 * x2
    o_ref[...] = y.astype(o_ref.dtype)


def _linear_small(x_t, w, b2d):
    """Gridless path for small B: one body, whole arrays resident in VMEM."""
    B = x_t.shape[1]
    return pl.pallas_call(
        linear_kernel,
        out_shape=jax.ShapeDtypeStruct((OUT_FEATURES, B), jnp.float32),
        in_specs=[
            pl.BlockSpec(memory_space=pltpu.MemorySpace.VMEM),
            pl.BlockSpec(memory_space=pltpu.MemorySpace.VMEM),
            pl.BlockSpec(memory_space=pltpu.MemorySpace.VMEM),
        ],
        out_specs=pl.BlockSpec(memory_space=pltpu.MemorySpace.VMEM),
    )(x_t, w, b2d)


def _linear_tiled(x_t, w, b2d, tile):
    """Pipelined path for large B: 1-D grid over the batch (lane) axis."""
    b_pad = x_t.shape[1]
    grid = (b_pad // tile,)
    return pl.pallas_call(
        linear_kernel,
        out_shape=jax.ShapeDtypeStruct((OUT_FEATURES, b_pad), jnp.float32),
        grid=grid,
        in_specs=[
            pl.BlockSpec((IN_FEATURES, tile), lambda i: (0, i)),
            pl.BlockSpec((OUT_FEATURES, IN_FEATURES), lambda i: (0, 0)),
            pl.BlockSpec((OUT_FEATURES, 1), lambda i: (0, 0)),
        ],
        out_specs=pl.BlockSpec((OUT_FEATURES, tile), lambda i: (0, i)),
        # Batch tiles are independent: shard across TensorCores (2 on v7x).
        compiler_params=pltpu.CompilerParams(
            dimension_semantics=("parallel",)),
    )(x_t, w, b2d)


@jax.jit
def linear_forward(x, w, b2d):
    """x: (B, 3) f32; w: (8, 3) f32; b2d: (8, 1) f32 -> (B, 8) f32."""
    B = x.shape[0]
    x_t = x.T                      # (3, B): batch-on-lanes layout hoist (trace time)
    if B < _SMALL_B_GRIDLESS:
        y_t = _linear_small(x_t, w, b2d)
    else:
        tile = _LANE_TILE
        b_pad = ((B + tile - 1) // tile) * tile
        if b_pad != B:
            x_t = jnp.pad(x_t, ((0, 0), (0, b_pad - B)))
        y_t = _linear_tiled(x_t, w, b2d, tile)
        y_t = y_t[:, :B]
    return y_t.T                   # (B, 8) to match nn.Linear output layout


def init_linear_params(key):
    """nn.Linear-style U(-1/sqrt(in), 1/sqrt(in)) init; bias reshaped once."""
    kw, kb = jax.random.split(key)
    bound = 1.0 / jnp.sqrt(jnp.float32(IN_FEATURES))
    weight = jax.random.uniform(
        kw, (OUT_FEATURES, IN_FEATURES), minval=-bound, maxval=bound,
        dtype=jnp.float32)                       # PyTorch layout (out, in)
    bias = jax.random.uniform(
        kb, (OUT_FEATURES,), minval=-bound, maxval=bound, dtype=jnp.float32)
    b2d = bias.reshape(OUT_FEATURES, 1)          # (out, 1), hoisted once
    return weight, bias, b2d


if __name__ == "__main__":
    key = jax.random.PRNGKey(0)
    kx, kx2, kp = jax.random.split(key, 3)

    weight, bias, b2d = init_linear_params(kp)

    # Small-batch case from the module spec (gridless path).
    batch = 8
    x1 = jax.random.normal(kx, (batch, IN_FEATURES), dtype=jnp.float32)
    x2 = linear_forward(x1, weight, b2d)
    jax.block_until_ready(x2)
    ref = x1 @ weight.T + bias
    assert x2.shape == (batch, OUT_FEATURES)
    assert jnp.allclose(x2, ref, atol=1e-5, rtol=1e-5), "mismatch (small B)"

    # Larger batch to exercise the tiled, pipelined, padded path.
    batch_big = 1000                              # pads to 1024, grid=(2,)
    xb = jax.random.normal(kx2, (batch_big, IN_FEATURES), dtype=jnp.float32)
    yb = linear_forward(xb, weight, b2d)
    jax.block_until_ready(yb)
    ref_b = xb @ weight.T + bias
    assert yb.shape == (batch_big, OUT_FEATURES)
    assert jnp.allclose(yb, ref_b, atol=1e-5, rtol=1e-5), "mismatch (tiled B)"

    print("KERNEL_OK")
</pallas_src>

<mosaic_0001>
module attributes {stable_mosaic.version = 11 : i64} {
  func.func @linear_kernel(%arg0: memref<3x8xf32, #tpu.memory_space<vmem>>, %arg1: memref<8x3xf32, #tpu.memory_space<vmem>>, %arg2: memref<8x1xf32, #tpu.memory_space<vmem>>, %arg3: memref<8x8xf32, #tpu.memory_space<vmem>>) attributes {dimension_semantics = [], scalar_prefetch = 0 : i64, scratch_operands = 0 : i64, tpu.core_type = #tpu.core_type<tc>} {
    %c0 = arith.constant 0 : index
    %c0_0 = arith.constant 0 : index
    %0 = vector.load %arg1[%c0, %c0_0] : memref<8x3xf32, #tpu.memory_space<vmem>>, vector<8x3xf32>
    %1 = vector.extract_strided_slice %0 {offsets = [0, 0], sizes = [8, 1], strides = [1, 1]} : vector<8x3xf32> to vector<8x1xf32>
    %2 = vector.extract_strided_slice %0 {offsets = [0, 1], sizes = [8, 1], strides = [1, 1]} : vector<8x3xf32> to vector<8x1xf32>
    %3 = vector.extract_strided_slice %0 {offsets = [0, 2], sizes = [8, 1], strides = [1, 1]} : vector<8x3xf32> to vector<8x1xf32>
    %c0_1 = arith.constant 0 : index
    %c0_2 = arith.constant 0 : index
    %4 = vector.load %arg0[%c0_1, %c0_2] : memref<3x8xf32, #tpu.memory_space<vmem>>, vector<1x8xf32>
    %c1 = arith.constant 1 : index
    %c0_3 = arith.constant 0 : index
    %5 = vector.load %arg0[%c1, %c0_3] : memref<3x8xf32, #tpu.memory_space<vmem>>, vector<1x8xf32>
    %c2 = arith.constant 2 : index
    %c0_4 = arith.constant 0 : index
    %6 = vector.load %arg0[%c2, %c0_4] : memref<3x8xf32, #tpu.memory_space<vmem>>, vector<1x8xf32>
    %c0_5 = arith.constant 0 : index
    %c0_6 = arith.constant 0 : index
    %7 = vector.load %arg2[%c0_5, %c0_6] : memref<8x1xf32, #tpu.memory_space<vmem>>, vector<8x1xf32>
    %8 = vector.broadcast %1 : vector<8x1xf32> to vector<8x8xf32>
    %9 = vector.broadcast %4 : vector<1x8xf32> to vector<8x8xf32>
    %10 = arith.mulf %8, %9 : vector<8x8xf32>
    %11 = vector.broadcast %7 : vector<8x1xf32> to vector<8x8xf32>
    %12 = arith.addf %11, %10 : vector<8x8xf32>
    %13 = vector.broadcast %2 : vector<8x1xf32> to vector<8x8xf32>
    %14 = vector.broadcast %5 : vector<1x8xf32> to vector<8x8xf32>
    %15 = arith.mulf %13, %14 : vector<8x8xf32>
    %16 = arith.addf %12, %15 : vector<8x8xf32>
    %17 = vector.broadcast %3 : vector<8x1xf32> to vector<8x8xf32>
    %18 = vector.broadcast %6 : vector<1x8xf32> to vector<8x8xf32>
    %19 = arith.mulf %17, %18 : vector<8x8xf32>
    %20 = arith.addf %16, %19 : vector<8x8xf32>
    %c0_7 = arith.constant 0 : index
    %c0_8 = arith.constant 0 : index
    %21 = vector.load %arg3[%c0_7, %c0_8] : memref<8x8xf32, #tpu.memory_space<vmem>>, vector<8x8xf32>
    tpu.vector_store %arg3[%c0_7, %c0_8], %20 {strides = array<i32>} : memref<8x8xf32, #tpu.memory_space<vmem>>, vector<8x8xf32>,
    return
  }
}

</mosaic_0001>

<llo_original>
// kernel: linear_forward.1
$region0: #{linear_forward.1}
  #allocation0 [shape = 'u32[]', space=smem, size = 0x4, offset = 0x4, fixed_abs, tag = 'smem constant byte address 0x4 - core index']
  #allocation1 [shape = 'u32[144,128]{1,0:T(1,128)}', space=vmem, size = 0x12000, scoped, tag = 'internal scratch']
  %s0 = inlined_call_operand.vmem [shape: f32[3,8], index: 0, kind: input, shape index: {}]
  %s1 = inlined_call_operand.vmem [shape: f32[8,3], index: 1, kind: input, shape index: {}]
  %s2 = inlined_call_operand.vmem [shape: f32[8,1], index: 2, kind: input, shape index: {}]
  %s3 = inlined_call_operand.vmem [shape: f32[8,8], index: 3, kind: output, shape index: {}]
  %s4 = sld [smem:[#allocation0]]
  $region22: #{linear_forward.1} parent=0
    _
  %s6 = ssub.s32 1, %s4
  %s7 = scalar_select 0, %s6, %s4
  // Predicated region
  $region2: #{linear_forward.1} parent=0 // pred_check
    _
  $region3: #{linear_forward.1} parent=0 // pred_check_branch
    %9 = sbr.rel (0) target = $region5
  $region4: #{linear_forward.1} parent=0 // pred_region
    _
  $region5: #{linear_forward.1} parent=0 // pred_fallthru
    _
  // Predicated region
  $region6: #{linear_forward.1} parent=0 // pred_check
    _
  $region7: #{linear_forward.1} parent=0 // pred_check_branch
    %11 = sbr.rel (0) target = $region9
  $region8: #{linear_forward.1} parent=0 // pred_region
    _
  $region9: #{linear_forward.1} parent=0 // pred_fallthru
    _
  // Predicated region
  $region10: #{linear_forward.1} parent=0 // pred_check
    _
  $region11: #{linear_forward.1} parent=0 // pred_check_branch
    %13 = sbr.rel (0) target = $region13
  $region12: #{linear_forward.1} parent=0 // pred_region
    _
  $region13: #{linear_forward.1} parent=0 // pred_fallthru
    _
  %v14 = vld [vmem:[%s1] sm:$0xff]
  %v15 = vld [vmem:[%s0] sm:$0x1]
  %v16 = vld [vmem:[%s0 + $0x1] sm:$0x1]
  %v17 = vld [vmem:[%s0 + $0x2] sm:$0x1]
  %v18 = vld [vmem:[%s2] sm:$0xff]
  %20 = vset.pattern.permute.xlu0 0
  %21 = vperm.xlu0 %20, %v14
  %v22 = vpop.permute.xlu0 %21
  %v24 = vlaneseq
  %v25 = vshrl.u32 %v24, 7
  %v26 = vsub.s32 0, %v25
  %v27 = vrot.slane %v15, %v26
  %v28 = vmul.f32 %v22, %v27
  %30 = vset.pattern.permute.xlu0 0
  %31 = vperm.xlu0 %30, %v18
  %v32 = vpop.permute.xlu0 %31
  %v34 = vadd.f32 %v32, %v28
  %35 = vset.pattern.permute.xlu0 1
  %36 = vperm.xlu0 %35, %v14
  %v37 = vpop.permute.xlu0 %36
  %v39 = vlaneseq
  %v40 = vshrl.u32 %v39, 7
  %v41 = vsub.s32 0, %v40
  %v42 = vrot.slane %v16, %v41
  %v43 = vmul.f32 %v37, %v42
  %v44 = vadd.f32 %v34, %v43
  %45 = vset.pattern.permute.xlu0 2
  %46 = vperm.xlu0 %45, %v14
  %v47 = vpop.permute.xlu0 %46
  %v49 = vlaneseq
  %v50 = vshrl.u32 %v49, 7
  %v51 = vsub.s32 0, %v50
  %v52 = vrot.slane %v17, %v51
  %v53 = vmul.f32 %v47, %v52
  %v54 = vadd.f32 %v44, %v53
  %vm55 = vcmask 64512
  %56 = vst.msk [vmem:[%s3] sm:$0xff] %vm55, %v54
  // Predicated region
  $region14: #{linear_forward.1} parent=0 // pred_check
    _
  $region15: #{linear_forward.1} parent=0 // pred_check_branch
    %58 = sbr.rel (0) target = $region17
  $region16: #{linear_forward.1} parent=0 // pred_region
    _
  $region17: #{linear_forward.1} parent=0 // pred_fallthru
    _
  // Predicated region
  $region18: #{linear_forward.1} parent=0 // pred_check
    _
  $region19: #{linear_forward.1} parent=0 // pred_check_branch
    %60 = sbr.rel (0) target = $region21
  $region20: #{linear_forward.1} parent=0 // pred_region
    _
  $region21: #{linear_forward.1} parent=0 // pred_fallthru
    _

</llo_original>
